<compile_context>
chip_gen: v5e
topology: v5e:2x2
jax: 0.10.0
libtpu: 0.0.40
codegen_flags: <defaults>
</compile_context>

<pallas_src>
import jax
import jax.numpy as jnp
from jax import lax
from jax.experimental import pallas as pl
from jax.experimental.pallas import tpu as pltpu

LN_EPS = 1e-5  # PyTorch nn.LayerNorm default eps used by unifold's LayerNorm

_TARGET_BLOCK_BYTES = 4 * 1024 * 1024   # ~4 MiB per input block
_VMEM_LIMIT_BYTES = 48 * 1024 * 1024    # <= v7x 64 MiB physical, > v5e 16 MiB default
_MIN_GRID_STEPS = 8                     # >= 4 steps per TC on v7x's 2 TensorCores


def _round_up(x: int, m: int) -> int:
    return ((x + m - 1) // m) * m


def _round_down(x: int, m: int) -> int:
    return (x // m) * m


def _layernorm_kernel(x_ref, w_ref, b_ref, o_ref):
    # x_ref: (tile_rows, D); w_ref/b_ref: (1, D) broadcast over rows.
    x = x_ref[...].astype(jnp.float32)
    d = x.shape[-1]
    inv_d = jnp.float32(1.0 / d)
    # Two-pass mean/variance (same XLU reduction count as one-pass, better
    # numerics).  Reductions are per-row, so garbage rows in a masked ragged
    # tail never touch valid rows.
    mean = jnp.sum(x, axis=-1, keepdims=True) * inv_d
    xc = x - mean
    var = jnp.sum(xc * xc, axis=-1, keepdims=True) * inv_d
    inv = lax.rsqrt(var + LN_EPS)
    w = w_ref[...].astype(jnp.float32)
    b = b_ref[...].astype(jnp.float32)
    o_ref[...] = (xc * inv * w + b).astype(o_ref.dtype)
    # (If a bundle dump ever shows the 2 XLU units saturated on v7x, the two
    # row-sums can be moved to the idle MXU via jnp.dot(x, ones((D,1))).)


@jax.jit
def pallas_layernorm(x, weight, bias):
    """LayerNorm over the last dim of x via a Pallas TPU kernel."""
    orig_shape = x.shape
    d = orig_shape[-1]
    rows = 1
    for s in orig_shape[:-1]:
        rows *= s
    x2 = x.reshape(rows, d)
    w2 = weight.reshape(1, d)
    b2 = bias.reshape(1, d)

    itemsize = x.dtype.itemsize
    # Sublane granularity: 8 for 32-bit, 16 for 16-bit dtypes.
    sublane = 16 if itemsize == 2 else 8

    # Size the block by bytes (~_TARGET_BLOCK_BYTES worth of input rows).
    target_rows = max(
        sublane, _round_down(_TARGET_BLOCK_BYTES // (d * itemsize), sublane))
    # Keep at least _MIN_GRID_STEPS grid steps when the tensor is big enough,
    # so v7x's two TensorCores both get pipelined work.
    cap_rows = max(sublane, _round_up(pl.cdiv(rows, _MIN_GRID_STEPS), sublane))
    tile_rows = min(target_rows, cap_rows)
    # Never use a block bigger than the (sublane-rounded) data itself.
    tile_rows = min(tile_rows, _round_up(rows, sublane))

    grid = (pl.cdiv(rows, tile_rows),)

    out = pl.pallas_call(
        _layernorm_kernel,
        out_shape=jax.ShapeDtypeStruct((rows, d), x.dtype),
        grid_spec=pltpu.PrefetchScalarGridSpec(
            num_scalar_prefetch=0,
            grid=grid,
            in_specs=[
                pl.BlockSpec((tile_rows, d), lambda i: (i, 0)),
                pl.BlockSpec((1, d), lambda i: (0, 0)),
                pl.BlockSpec((1, d), lambda i: (0, 0)),
            ],
            out_specs=pl.BlockSpec((tile_rows, d), lambda i: (i, 0)),
        ),
        compiler_params=pltpu.CompilerParams(
            dimension_semantics=("parallel",),
            vmem_limit_bytes=_VMEM_LIMIT_BYTES,
        ),
    )(x2, w2, b2)

    return out.reshape(orig_shape)


class RecyclingEmbedderPallas:
    """JAX/Pallas port of unifold RecyclingEmbedder.forward."""

    def __init__(self, d_msa, d_pair, min_bin, max_bin, num_bins,
                 inf=1e8, key=None):
        self.d_msa = d_msa
        self.d_pair = d_pair
        self.min_bin = min_bin
        self.max_bin = max_bin
        self.num_bins = num_bins
        self.inf = inf
        if key is None:
            key = jax.random.PRNGKey(0)
        k1, k2, k3, k4 = jax.random.split(key, 4)
        # Deterministic synthetic parameters (module init shapes):
        #   layer_norm_m: weight/bias of shape (d_msa,)
        #   layer_norm_z: weight/bias of shape (d_pair,)
        self.ln_m_w = 1.0 + 0.1 * jax.random.normal(k1, (d_msa,), jnp.float32)
        self.ln_m_b = 0.1 * jax.random.normal(k2, (d_msa,), jnp.float32)
        self.ln_z_w = 1.0 + 0.1 * jax.random.normal(k3, (d_pair,), jnp.float32)
        self.ln_z_b = 0.1 * jax.random.normal(k4, (d_pair,), jnp.float32)
        # TODO(synk): recyle_pos (distogram binning + Linear(num_bins, d_pair))
        # is a separate method, not part of forward(); not implemented here.

    def forward(self, m, z):
        m_update = pallas_layernorm(m, self.ln_m_w, self.ln_m_b)
        z_update = pallas_layernorm(z, self.ln_z_w, self.ln_z_b)
        return m_update, z_update


def _reference_layernorm(x, w, b):
    xf = x.astype(jnp.float32)
    mean = jnp.mean(xf, axis=-1, keepdims=True)
    var = jnp.mean((xf - mean) ** 2, axis=-1, keepdims=True)
    y = (xf - mean) / jnp.sqrt(var + LN_EPS) * w + b
    return y.astype(x.dtype)


if __name__ == "__main__":
    key = jax.random.PRNGKey(0)
    k_m, k_z, k_params = jax.random.split(key, 3)

    # Small shapes consistent with the module's conventions:
    #   m: [batch, n_seq, n_res, d_msa], z: [batch, n_res, n_res, d_pair]
    batch, n_seq, n_res = 2, 4, 8
    d_msa, d_pair = 32, 64

    m = jax.random.normal(k_m, (batch, n_seq, n_res, d_msa), jnp.float32)
    z = jax.random.normal(k_z, (batch, n_res, n_res, d_pair), jnp.float32)

    emb = RecyclingEmbedderPallas(
        d_msa=d_msa, d_pair=d_pair,
        min_bin=3.25, max_bin=20.75, num_bins=15,
        key=k_params,
    )

    m_update, z_update = emb.forward(m, z)
    jax.block_until_ready(m_update)
    jax.block_until_ready(z_update)

    # Correctness check against a pure-JAX reference.
    m_ref = _reference_layernorm(m, emb.ln_m_w, emb.ln_m_b)
    z_ref = _reference_layernorm(z, emb.ln_z_w, emb.ln_z_b)
    assert jnp.allclose(m_update, m_ref, atol=1e-5, rtol=1e-5)
    assert jnp.allclose(z_update, z_ref, atol=1e-5, rtol=1e-5)
    assert m_update.shape == m.shape and m_update.dtype == m.dtype
    assert z_update.shape == z.shape and z_update.dtype == z.dtype

    # Extra check: a row count that is NOT a multiple of the sublane/tile
    # granularity, at a production-like lane-dense feature dim, exercising the
    # pad-free ragged last block (masked store) path.
    k_big = jax.random.PRNGKey(7)
    big = jax.random.normal(k_big, (3, 37, 128), jnp.float32)
    w_big = 1.0 + 0.05 * jax.random.normal(jax.random.PRNGKey(8), (128,), jnp.float32)
    b_big = 0.05 * jax.random.normal(jax.random.PRNGKey(9), (128,), jnp.float32)
    big_out = pallas_layernorm(big, w_big, b_big)
    jax.block_until_ready(big_out)
    assert jnp.allclose(big_out, _reference_layernorm(big, w_big, b_big),
                        atol=1e-5, rtol=1e-5)

    print("KERNEL_OK")
</pallas_src>

<mosaic_0001>
module attributes {stable_mosaic.version = 11 : i64} {
  func.func @_layernorm_kernel(%arg0: i32, %arg1: memref<8x32xf32, #tpu.memory_space<vmem>>, %arg2: memref<1x32xf32, #tpu.memory_space<vmem>>, %arg3: memref<1x32xf32, #tpu.memory_space<vmem>>, %arg4: memref<8x32xf32, #tpu.memory_space<vmem>>) attributes {dimension_semantics = [#tpu.dimension_semantics<parallel>], iteration_bounds = array<i64: 8>, scalar_prefetch = 0 : i64, scratch_operands = 0 : i64, tpu.core_type = #tpu.core_type<tc>, window_params = [{transform_indices = @transform_0, window_bounds = array<i64: 8, 32>}, {pipeline_mode = #tpu.pipeline_mode<synchronous>, transform_indices = @transform_1, window_bounds = array<i64: 1, 32>}, {pipeline_mode = #tpu.pipeline_mode<synchronous>, transform_indices = @transform_2, window_bounds = array<i64: 1, 32>}, {transform_indices = @transform_3, window_bounds = array<i64: 8, 32>}]} {
    %c0 = arith.constant 0 : index
    %c0_0 = arith.constant 0 : index
    %0 = vector.load %arg1[%c0, %c0_0] : memref<8x32xf32, #tpu.memory_space<vmem>>, vector<8x32xf32>
    %cst = arith.constant dense<0.000000e+00> : vector<8xf32>
    %1 = vector.multi_reduction <add>, %0, %cst [1] : vector<8x32xf32> to vector<8xf32>
    %2 = vector.shape_cast %1 : vector<8xf32> to vector<8x1xf32>
    %cst_1 = arith.constant 3.125000e-02 : f32
    %3 = vector.broadcast %cst_1 : f32 to vector<8x1xf32>
    %4 = arith.mulf %2, %3 : vector<8x1xf32>
    %5 = vector.broadcast %4 : vector<8x1xf32> to vector<8x32xf32>
    %6 = arith.subf %0, %5 : vector<8x32xf32>
    %7 = arith.mulf %6, %6 : vector<8x32xf32>
    %cst_2 = arith.constant dense<0.000000e+00> : vector<8xf32>
    %8 = vector.multi_reduction <add>, %7, %cst_2 [1] : vector<8x32xf32> to vector<8xf32>
    %9 = vector.shape_cast %8 : vector<8xf32> to vector<8x1xf32>
    %cst_3 = arith.constant 3.125000e-02 : f32
    %10 = vector.broadcast %cst_3 : f32 to vector<8x1xf32>
    %11 = arith.mulf %9, %10 : vector<8x1xf32>
    %cst_4 = arith.constant 9.99999974E-6 : f32
    %12 = vector.broadcast %cst_4 : f32 to vector<8x1xf32>
    %13 = arith.addf %11, %12 : vector<8x1xf32>
    %14 = math.rsqrt %13 : vector<8x1xf32>
    %c0_5 = arith.constant 0 : index
    %c0_6 = arith.constant 0 : index
    %15 = vector.load %arg2[%c0_5, %c0_6] : memref<1x32xf32, #tpu.memory_space<vmem>>, vector<1x32xf32>
    %c0_7 = arith.constant 0 : index
    %c0_8 = arith.constant 0 : index
    %16 = vector.load %arg3[%c0_7, %c0_8] : memref<1x32xf32, #tpu.memory_space<vmem>>, vector<1x32xf32>
    %17 = vector.broadcast %14 : vector<8x1xf32> to vector<8x32xf32>
    %18 = arith.mulf %6, %17 : vector<8x32xf32>
    %19 = vector.broadcast %15 : vector<1x32xf32> to vector<8x32xf32>
    %20 = arith.mulf %18, %19 : vector<8x32xf32>
    %21 = vector.broadcast %16 : vector<1x32xf32> to vector<8x32xf32>
    %22 = arith.addf %20, %21 : vector<8x32xf32>
    %c0_9 = arith.constant 0 : index
    %c0_10 = arith.constant 0 : index
    %23 = vector.load %arg4[%c0_9, %c0_10] : memref<8x32xf32, #tpu.memory_space<vmem>>, vector<8x32xf32>
    tpu.vector_store %arg4[%c0_9, %c0_10], %22 {strides = array<i32>} : memref<8x32xf32, #tpu.memory_space<vmem>>, vector<8x32xf32>,
    return
  }
  func.func @transform_0(%arg0: i32) -> (i32, i32) {
    %c0_i32 = arith.constant 0 : i32
    %c0_i32_0 = arith.constant 0 : i32
    return %arg0, %c0_i32 : i32, i32
  }
  func.func @transform_1(%arg0: i32) -> (i32, i32) {
    %c0_i32 = arith.constant 0 : i32
    %c0_i32_0 = arith.constant 0 : i32
    %c0_i32_1 = arith.constant 0 : i32
    return %c0_i32, %c0_i32_0 : i32, i32
  }
  func.func @transform_2(%arg0: i32) -> (i32, i32) {
    %c0_i32 = arith.constant 0 : i32
    %c0_i32_0 = arith.constant 0 : i32
    %c0_i32_1 = arith.constant 0 : i32
    return %c0_i32, %c0_i32_0 : i32, i32
  }
  func.func @transform_3(%arg0: i32) -> (i32, i32) {
    %c0_i32 = arith.constant 0 : i32
    %c0_i32_0 = arith.constant 0 : i32
    return %arg0, %c0_i32 : i32, i32
  }
}

</mosaic_0001>

<llo_original>
// kernel: pallas_layernorm.1
$region0: #{pallas_layernorm.1}
  #allocation0 [shape = 'u32[]', space=smem, size = 0x4, offset = 0x4, fixed_abs, tag = 'smem constant byte address 0x4 - core index']
  #allocation1 [shape = 'u32[72,128]{1,0:T(1,128)}', space=vmem, size = 0x9000, scoped, tag = 'internal scratch']
  %s0 = inlined_call_operand.hbm [shape: f32[64,32], index: 0, kind: input, shape index: {}]
  %s1 = inlined_call_operand.vmem [shape: f32[1,32], index: 1, kind: input, shape index: {}]
  %s2 = inlined_call_operand.vmem [shape: f32[1,32], index: 2, kind: input, shape index: {}]
  %s3 = inlined_call_operand.hbm [shape: f32[64,32], index: 3, kind: output, shape index: {}]
  %s4 = sld [smem:[#allocation0]]
  $region49: #{pallas_layernorm.1} parent=0
    _
  %s6 = ssub.s32 1, %s4
  %s7 = scalar_select 0, %s6, %s4
  $region1: #{pallas_layernorm.1} parent=0
    #allocation2 [shape = 'u8[8192]{0}', space=vmem, size = 0x2000, scoped, tag = 'input window, operand 0']
    #allocation3 [shape = 's32[2]{0}', space=sflag, size = 0x8, scoped, tag = 'scoped memory for pallas_layernorm.1']
    #allocation4 [shape = 's32[2]{0}', space=sflag, size = 0x8, scoped, tag = 'scoped memory for pallas_layernorm.1']
    #allocation5 [shape = 'u8[8192]{0}', space=vmem, size = 0x2000, scoped, tag = 'output window, operand 0']
    %8 = vsyncpa [#allocation3], 0
    %s9 = scalar_lea.sflag [#allocation3], 1
    %10 = vsyncpa %s9, 0
    %11 = vsyncpa [#allocation4], 0
    %s12 = scalar_lea.sflag [#allocation4], 1
    %13 = vsyncpa %s12, 0
    loop: start=0, step=1, limit=10
    $region2: #{pallas_layernorm.1} parent=1 // loop_pre_header
      _
    $region3: #{pallas_layernorm.1} parent=1 // loop_header
      %s15 = sphi 0, %s19
      %p16 = scmp.ge.s32.totalorder %s15, 10
      %s25 = sphi 0, %s27
      %s28 = sphi 0, %s25
      %s29 = sphi 0, %s28
      %s45 = sphi 0, %s29
      %s49 = sphi 0, %s49
      %s51 = sphi 0, %s49
      %s52 = sphi 0, %s51
      %s66 = sphi 0, %s52
      %s70 = sphi 0, %s70
      %s72 = sphi 0, %s70
      %s73 = sphi 0, %s72
      %s87 = sphi 0, %s73
      %s93 = sphi 0, %s95
      %s96 = sphi 0, %s93
      %s97 = sphi 0, %s96
      %s113 = sphi 0, %s97
    $region4: #{pallas_layernorm.1} parent=1 // loop_header_branch
      %18 = sbr.rel (%p16) target = $region8
    $region5: #{pallas_layernorm.1} parent=1 // loop_body
      %s20 = ssub.s32 %s15, 1
      %s21 = ssub.s32 %s15, 2
      %s22 = sadd.s32 %s15, 1
      %s23 = ssub.s32 %s15, %s22
      %p24 = scmp.eq.s32.totalorder %s23, 0
      %s26 = sadd.s32 %s25, 1
      %s27 = scalar_select %p24, %s25, %s26
      %p30 = pneg %p24
      %p31 = scmp.eq.s32.totalorder %s15, 7
      %p32 = por %p30, %p31
      %p33 = scmp.ne.s32.totalorder %s25, %s28
      %p34 = scmp.eq.s32.totalorder %s15, 0
      %p35 = por %p33, %p34
      %p36 = scmp.ne.s32.totalorder %s25, %s28
      %p37 = scmp.eq.s32.totalorder %s20, 7
      %p38 = por %p36, %p37
      %p39 = scmp.ne.s32.totalorder %s28, %s29
      %p40 = scmp.eq.s32.totalorder %s20, 0
      %p41 = por %p39, %p40
      %p42 = scmp.ne.s32.totalorder %s28, %s29
      %p43 = scmp.eq.s32.totalorder %s21, 7
      %p44 = por %p42, %p43
      %p46 = scmp.ne.s32.totalorder %s29, %s45
      %p47 = scmp.eq.s32.totalorder %s21, 0
      %p48 = por %p46, %p47
      %s50 = sadd.s32 %s49, 1
      %p53 = scmp.eq.s32.totalorder %s15, 7
      %p54 = scmp.ne.s32.totalorder %s49, %s51
      %p55 = scmp.eq.s32.totalorder %s15, 0
      %p56 = por %p54, %p55
      %p57 = scmp.ne.s32.totalorder %s49, %s51
      %p58 = scmp.eq.s32.totalorder %s20, 7
      %p59 = por %p57, %p58
      %p60 = scmp.ne.s32.totalorder %s51, %s52
      %p61 = scmp.eq.s32.totalorder %s20, 0
      %p62 = por %p60, %p61
      %p63 = scmp.ne.s32.totalorder %s51, %s52
      %p64 = scmp.eq.s32.totalorder %s21, 7
      %p65 = por %p63, %p64
      %p67 = scmp.ne.s32.totalorder %s52, %s66
      %p68 = scmp.eq.s32.totalorder %s21, 0
      %p69 = por %p67, %p68
      %s71 = sadd.s32 %s70, 1
      %p74 = scmp.eq.s32.totalorder %s15, 7
      %p75 = scmp.ne.s32.totalorder %s70, %s72
      %p76 = scmp.eq.s32.totalorder %s15, 0
      %p77 = por %p75, %p76
      %p78 = scmp.ne.s32.totalorder %s70, %s72
      %p79 = scmp.eq.s32.totalorder %s20, 7
      %p80 = por %p78, %p79
      %p81 = scmp.ne.s32.totalorder %s72, %s73
      %p82 = scmp.eq.s32.totalorder %s20, 0
      %p83 = por %p81, %p82
      %p84 = scmp.ne.s32.totalorder %s72, %s73
      %p85 = scmp.eq.s32.totalorder %s21, 7
      %p86 = por %p84, %p85
      %p88 = scmp.ne.s32.totalorder %s73, %s87
      %p89 = scmp.eq.s32.totalorder %s21, 0
      %p90 = por %p88, %p89
      %s91 = ssub.s32 %s15, %s22
      %p92 = scmp.eq.s32.totalorder %s91, 0
      %s94 = sadd.s32 %s93, 1
      %s95 = scalar_select %p92, %s93, %s94
      %p98 = pneg %p92
      %p99 = scmp.eq.s32.totalorder %s15, 7
      %p100 = por %p98, %p99
      %p101 = scmp.ne.s32.totalorder %s93, %s96
      %p102 = scmp.eq.s32.totalorder %s15, 0
      %p103 = por %p101, %p102
      %p104 = scmp.ne.s32.totalorder %s93, %s96
      %p105 = scmp.eq.s32.totalorder %s20, 7
      %p106 = por %p104, %p105
      %p107 = scmp.ne.s32.totalorder %s96, %s97
      %p108 = scmp.eq.s32.totalorder %s20, 0
      %p109 = por %p107, %p108
      %p110 = scmp.ne.s32.totalorder %s96, %s97
      %p111 = scmp.eq.s32.totalorder %s21, 7
      %p112 = por %p110, %p111
      %p114 = scmp.ne.s32.totalorder %s97, %s113
      %p115 = scmp.eq.s32.totalorder %s21, 0
      %p116 = por %p114, %p115
      %p117 = scmp.le.s32.totalorder 1, %s15
      %p118 = scmp.lt.s32.totalorder %s15, 9
      %p119 = pnand %p117, %p118
      %p120 = pneg %p119
      // Predicated region
      $region9: #{pallas_layernorm.1} parent=5 // pred_check
        _
      $region10: #{pallas_layernorm.1} parent=5 // pred_check_branch
        %122 = sbr.rel (%p119) target = $region12
      $region11: #{pallas_layernorm.1} parent=5 // pred_region
        %s123 = ssub.s32 %s15, 1
        // Predicated region
        $region13: #{pallas_layernorm.1} parent=11 // pred_check
          %p124 = pneg %p62
        $region14: #{pallas_layernorm.1} parent=11 // pred_check_branch
          %126 = sbr.rel (%p124) target = $region16
        $region15: #{pallas_layernorm.1} parent=11 // pred_region
          _
        $region16: #{pallas_layernorm.1} parent=11 // pred_fallthru
          _
        // Predicated region
        $region17: #{pallas_layernorm.1} parent=11 // pred_check
          %p127 = pneg %p83
        $region18: #{pallas_layernorm.1} parent=11 // pred_check_branch
          %129 = sbr.rel (%p127) target = $region20
        $region19: #{pallas_layernorm.1} parent=11 // pred_region
          _
        $region20: #{pallas_layernorm.1} parent=11 // pred_fallthru
          _
      $region12: #{pallas_layernorm.1} parent=5 // pred_fallthru
        _
      %p130 = scmp.lt.s32.totalorder %s15, 8
      // Predicated region
      $region21: #{pallas_layernorm.1} parent=5 // pred_check
        %p131 = pneg %p130
      $region22: #{pallas_layernorm.1} parent=5 // pred_check_branch
        %133 = sbr.rel (%p131) target = $region24
      $region23: #{pallas_layernorm.1} parent=5 // pred_region
        // Predicated region
        $region25: #{pallas_layernorm.1} parent=23 // pred_check
          %p134 = pneg %p35
        $region26: #{pallas_layernorm.1} parent=23 // pred_check_branch
          %136 = sbr.rel (%p134) target = $region28
        $region27: #{pallas_layernorm.1} parent=23 // pred_region
          %s137 = sand.u32 %s25, 1
          %s138 = scalar_lea.sflag [#allocation3], %s137
          %s139 = sand.u32 %s25, 1
          %s140 = smul.addr %s139, 8
          %s141 = scalar_lea.vmem [#allocation2], %s140
          %143 = vsyncadd %s138, 0
          %s144 = smul.addr %s15, 8
          %s145 = scalar_lea.hbm %s0, %s144
          %s147 = sshll.u32 %s145, 4
          %s148 = int_to_ptr.hbm [resolvable:$true] %s147
          %s149 = sshll.u32 %s141, 4
          %s150 = int_to_ptr.vmem [resolvable:$true] %s149
          %152 = dma.hbm_to_vmem [thread:$0]  %s148, 128, %s150, %s138
        $region28: #{pallas_layernorm.1} parent=23 // pred_fallthru
          _
      $region24: #{pallas_layernorm.1} parent=5 // pred_fallthru
        _
      %p153 = scmp.le.s32.totalorder 1, %s15
      %p154 = scmp.lt.s32.totalorder %s15, 9
      %p155 = pnand %p153, %p154
      %p156 = pneg %p155
      // Predicated region
      $region29: #{pallas_layernorm.1} parent=5 // pred_check
        _
      $region30: #{pallas_layernorm.1} parent=5 // pred_check_branch
        %158 = sbr.rel (%p155) target = $region32
      $region31: #{pallas_layernorm.1} parent=5 // pred_region
        %s159 = ssub.s32 %s15, 1
        %s160 = sand.u32 %s28, 1
        %s161 = scalar_lea.sflag [#allocation3], %s160
        %s162 = sand.u32 %s28, 1
        %s163 = smul.addr %s162, 8
        %s164 = scalar_lea.vmem [#allocation2], %s163
        // Predicated region
        $region33: #{pallas_layernorm.1} parent=31 // pred_check
          %p165 = pneg %p41
        $region34: #{pallas_layernorm.1} parent=31 // pred_check_branch
          %167 = sbr.rel (%p165) target = $region36
        $region35: #{pallas_layernorm.1} parent=31 // pred_region
          %169 = dma.done %s161, 128
        $region36: #{pallas_layernorm.1} parent=31 // pred_fallthru
          _
        %s170 = sand.u32 %s28, 1
        %s171 = scalar_lea.sflag [#allocation3], %s170
        %s172 = sand.u32 %s28, 1
        %s173 = smul.addr %s172, 8
        %s174 = scalar_lea.vmem [#allocation2], %s173
        %p175 = pneg %p41
        %p176 = pneg %p38
        %p177 = pneg %p62
        %p178 = pneg %p59
        %p179 = pneg %p83
        %p180 = pneg %p80
        %p181 = pneg %p109
        %p182 = pneg %p106
        %s183 = sand.u32 %s96, 1
        %s184 = scalar_lea.sflag [#allocation4], %s183
        %s185 = sand.u32 %s96, 1
        %s186 = smul.addr %s185, 8
        %s187 = scalar_lea.vmem [#allocation5], %s186
        %v188 = vld [vmem:[%s164] sm:$0xff]
        %vm189 = vcmask 261120
        %v190 = vsel %vm189, %v188, 0.0
        %191 = vadd.xlane.f32.xlu0 %v190
        %v192 = vpop.xlane.xlu0 %191
        %v193 = vmul.f32 %v192, 0.03125
        %v194 = vsub.f32 %v188, %v193
        %v195 = vmul.f32 %v194, %v194
        %v196 = vsel %vm189, %v195, 0.0
        %197 = vadd.xlane.f32.xlu0 %v196
        %v198 = vpop.xlane.xlu0 %197
        %v199 = vmul.f32 %v198, 0.03125
        %v200 = vadd.f32 %v199, 1e-05
        %v201 = vrsqrt.pop %v200
        %v202 = vmul.f32 %v201, %v200
        %v203 = vmul.f32 %v202, %v201
        %v204 = vmul.f32 0.5, %v203
        %v205 = vsub.f32 1.5, %v204
        %v206 = vmul.f32 %v201, %v205
        %vm207 = vweird.f32 %v200
        %vm208 = vweird.f32 %v201
        %vm209 = vmor %vm207, %vm208
        %v210 = vsel %vm209, %v201, %v206
        %v211 = vld [vmem:[%s1] sm:$0x1]
        %v212 = vld [vmem:[%s2] sm:$0x1]
        %v213 = vmul.f32 %v194, %v210
        %v215 = vperm.slane %v211, 0
        %v217 = vmul.f32 %v213, %v215
        %v219 = vperm.slane %v212, 0
        %v221 = vadd.f32 %v217, %v219
        %222 = vst.msk [vmem:[%s187] sm:$0xff] %vm189, %v221
        %s223 = sand.u32 %s96, 1
        %s224 = scalar_lea.sflag [#allocation4], %s223
        %s225 = sand.u32 %s96, 1
        %s226 = smul.addr %s225, 8
        %s227 = scalar_lea.vmem [#allocation5], %s226
        // Predicated region
        $region37: #{pallas_layernorm.1} parent=31 // pred_check
          %p228 = pneg %p106
        $region38: #{pallas_layernorm.1} parent=31 // pred_check_branch
          %230 = sbr.rel (%p228) target = $region40
        $region39: #{pallas_layernorm.1} parent=31 // pred_region
          %232 = vsyncadd %s224, 0
          %s233 = smul.addr %s20, 8
          %s234 = scalar_lea.hbm %s3, %s233
          %s236 = sshll.u32 %s227, 4
          %s237 = int_to_ptr.vmem [resolvable:$true] %s236
          %s238 = sshll.u32 %s234, 4
          %s239 = int_to_ptr.hbm [resolvable:$true] %s238
          %241 = dma.vmem_to_hbm [thread:$0]  %s237, 128, %s239, %s224
        $region40: #{pallas_layernorm.1} parent=31 // pred_fallthru
          _
      $region32: #{pallas_layernorm.1} parent=5 // pred_fallthru
        _
      %p242 = scmp.le.s32.totalorder 2, %s15
      // Predicated region
      $region41: #{pallas_layernorm.1} parent=5 // pred_check
        %p243 = pneg %p242
      $region42: #{pallas_layernorm.1} parent=5 // pred_check_branch
        %245 = sbr.rel (%p243) target = $region44
      $region43: #{pallas_layernorm.1} parent=5 // pred_region
        %s246 = ssub.s32 %s15, 2
        // Predicated region
        $region45: #{pallas_layernorm.1} parent=43 // pred_check
          %p247 = pneg %p112
        $region46: #{pallas_layernorm.1} parent=43 // pred_check_branch
          %249 = sbr.rel (%p247) target = $region48
        $region47: #{pallas_layernorm.1} parent=43 // pred_region
          %s250 = sand.u32 %s97, 1
          %s251 = scalar_lea.sflag [#allocation4], %s250
          %s252 = sand.u32 %s97, 1
          %s253 = smul.addr %s252, 8
          %s254 = scalar_lea.vmem [#allocation5], %s253
          %256 = dma.done %s251, 128
        $region48: #{pallas_layernorm.1} parent=43 // pred_fallthru
          _
      $region44: #{pallas_layernorm.1} parent=5 // pred_fallthru
        _
    $region6: #{pallas_layernorm.1} parent=1 // loop_footer
      %s19 = sadd.s32 1, %s15
    $region7: #{pallas_layernorm.1} parent=1 // loop_footer_branch
      %14 = sbr.rel target = $region3
    $region8: #{pallas_layernorm.1} parent=1 // loop_exit
      _
    %257 = vsyncpa [#allocation3], 1
    %s258 = scalar_lea.sflag [#allocation3], 1
    %259 = vsyncpa %s258, 1
    %260 = vsyncpa [#allocation4], 1
    %s261 = scalar_lea.sflag [#allocation4], 1
    %262 = vsyncpa %s261, 1

</llo_original>
